<compile_context>
chip_gen: v6e
topology: v6e:2x2x1
jax: 0.10.0
libtpu: 0.0.40
codegen_flags: <defaults>
</compile_context>

<pallas_src>
import jax
import jax.numpy as jnp
from jax.experimental import pallas as pl
from jax.experimental.pallas import tpu as pltpu

_LANES = 128
_SUBLANES = 8
_SMALL_UNALIGNED_BYTES = 512 * 1024          # single-block path cap (VMEM-safe)


def _sublane_multiple(*dtypes):
    """Row-tiling multiple: 8 for 32-bit, 16 for bf16, 32 for int8/fp8."""
    m = _SUBLANES
    for dt in dtypes:
        itemsize = min(4, jnp.dtype(dt).itemsize)
        m = max(m, _SUBLANES * max(1, 4 // itemsize))
    return m


def _tpu_hints():
    """(block byte budget per buffer, vmem_limit_bytes, prefer balanced even grid)."""
    try:
        kind = jax.devices()[0].device_kind.lower()
    except Exception:
        kind = ""
    if "7" in kind:
        # v7x: 2 TensorCores/chip, 3.2 TB/s HBM, 64 MiB VMEM/TC.  Bigger blocks
        # amortize the ~0.35us/step overhead; 2 x 8 MiB double-buffered = 32 MiB.
        return 8 * 1024 * 1024, 48 * 1024 * 1024, True
    # v5e / v6e: single TensorCore; ~4 MiB tiles already sit at ~85% of the HBM
    # roofline, bigger tiles or forced grid splits buy nothing.
    return 4 * 1024 * 1024, 32 * 1024 * 1024, False


def _make_scale_kernel(divisor, cast_to):
    def kernel(x_ref, o_ref):
        x = x_ref[...]
        if cast_to is not None:
            x = x.astype(cast_to)          # fused int -> f32 promotion
        # True division for bit parity with PyTorch's `/` (still HBM-bound).
        o_ref[...] = (x / divisor).astype(o_ref.dtype)
    return kernel


def _scale_2d(x2d, divisor, out_dtype, needs_cast):
    """Run the elementwise divide over a 2-D slab with generation-aware tiling."""
    rows, cols = x2d.shape
    budget, vmem_limit, prefer_even = _tpu_hints()
    in_bytes = jnp.dtype(x2d.dtype).itemsize
    out_bytes = jnp.dtype(out_dtype).itemsize
    per_row_bytes = cols * max(in_bytes, out_bytes)
    sub = _sublane_multiple(x2d.dtype, out_dtype)

    # Block rows from the byte budget; no row padding of the array itself —
    # Pallas masks the (possibly partial) boundary block.
    tile_rows = max(1, budget // per_row_bytes)
    if tile_rows >= rows:
        tile_rows = rows                     # whole row extent: always layout-legal
    else:
        tile_rows = max(sub, (tile_rows // sub) * sub)
        if tile_rows >= rows:
            tile_rows = rows

    grid_steps = pl.cdiv(rows, tile_rows)
    if prefer_even and grid_steps > 1 and grid_steps % 2 == 1:
        # v7x megacore: even step count -> both TensorCores get balanced work.
        cand = -(-rows // (grid_steps + 1))
        cand = max(sub, -(-cand // sub) * sub)
        if cand < rows:
            tile_rows = cand
            grid_steps = pl.cdiv(rows, tile_rows)

    kernel = _make_scale_kernel(divisor, jnp.float32 if needs_cast else None)
    return pl.pallas_call(
        kernel,
        out_shape=jax.ShapeDtypeStruct((rows, cols), out_dtype),
        grid=(grid_steps,),
        in_specs=[pl.BlockSpec((tile_rows, cols), lambda i: (i, 0))],
        out_specs=pl.BlockSpec((tile_rows, cols), lambda i: (i, 0)),
        compiler_params=pltpu.CompilerParams(
            dimension_semantics=("parallel",),
            vmem_limit_bytes=vmem_limit,
        ),
        cost_estimate=pl.CostEstimate(
            flops=rows * cols,
            transcendentals=0,
            bytes_accessed=rows * cols * (in_bytes + out_bytes),
        ),
    )(x2d)


def kl_criterium(output: jax.Array, target: jax.Array, *, use_pallas: bool = True) -> jax.Array:
    """output / len(target), computed in a Pallas TPU kernel."""
    n = int(target.shape[0])                  # static at trace time (len(target))
    divisor = float(n)

    orig_shape = output.shape
    needs_cast = not jnp.issubdtype(output.dtype, jnp.floating)
    out_dtype = jnp.float32 if needs_cast else output.dtype

    if not use_pallas:
        # Inside a larger jitted graph a constant scale fuses for free in XLA;
        # prefer this path there instead of paying a pallas_call fusion barrier.
        x = output.astype(out_dtype) if needs_cast else output
        return x / divisor

    total = 1
    for d in orig_shape:
        total *= int(d)
    if total == 0:
        return jnp.zeros(orig_shape, out_dtype)

    flat = output.reshape(-1)                 # free: contiguous bitcast

    # ---- fast path: lane-dense factorization, no pad / no slice -------------
    cols = None
    for c in (4 * _LANES, 2 * _LANES, _LANES):
        if total % c == 0:
            cols = c
            break
    if cols is not None:
        res = _scale_2d(flat.reshape(total // cols, cols), divisor, out_dtype, needs_cast)
        return res.reshape(orig_shape)

    # ---- unaligned & small: one full-array block (1, total), no pad/slice ---
    if total * max(jnp.dtype(output.dtype).itemsize, jnp.dtype(out_dtype).itemsize) \
            <= _SMALL_UNALIGNED_BYTES:
        res = _scale_2d(flat.reshape(1, total), divisor, out_dtype, needs_cast)
        return res.reshape(orig_shape)

    # ---- unaligned & large (rare): minimal pad to the next lane multiple ----
    # TODO(synk): a 1-D masked BlockSpec would avoid this extra pad/slice pass.
    padded = -(-total // _LANES) * _LANES
    flat = jnp.pad(flat, (0, padded - total))
    res = _scale_2d(flat.reshape(padded // _LANES, _LANES), divisor, out_dtype, needs_cast)
    return res.reshape(-1)[:total].reshape(orig_shape)


if __name__ == "__main__":
    key = jax.random.PRNGKey(0)
    k1, k2, k3, k4 = jax.random.split(key, 4)

    # `output` like a per-sample prediction tensor, `target` a batch (len = 8).
    output = jax.random.normal(k1, (2, 4, 16, 16), dtype=jnp.float32)
    target = jax.random.normal(k2, (8, 4), dtype=jnp.float32)

    got = jax.block_until_ready(kl_criterium(output, target))
    expected = output / target.shape[0]
    assert got.shape == output.shape and got.dtype == output.dtype
    assert jnp.allclose(got, expected, rtol=1e-6, atol=1e-6)

    # Non-128-aligned shape: exercises the no-pad single-block path.
    output2 = jax.random.normal(k3, (3, 5, 7), dtype=jnp.float32)       # 105 elements
    got2 = jax.block_until_ready(kl_criterium(output2, target))
    expected2 = output2 / target.shape[0]
    assert got2.shape == output2.shape and got2.dtype == output2.dtype
    assert jnp.allclose(got2, expected2, rtol=1e-6, atol=1e-6)

    # Integer input: promotion to float32 is fused inside the kernel.
    output3 = jax.random.randint(k4, (4, 32), 0, 10, dtype=jnp.int32)   # 128 elements
    got3 = jax.block_until_ready(kl_criterium(output3, target))
    expected3 = output3 / target.shape[0]
    assert got3.shape == output3.shape and got3.dtype == jnp.float32
    assert jnp.allclose(got3, expected3, rtol=1e-6, atol=1e-6)

    print("KERNEL_OK")
</pallas_src>

<mosaic_0001>
module attributes {stable_mosaic.version = 11 : i64} {
  func.func @kernel(%arg0: i32, %arg1: memref<4x512xf32, #tpu.memory_space<vmem>>, %arg2: memref<4x512xf32, #tpu.memory_space<vmem>>) attributes {dimension_semantics = [#tpu.dimension_semantics<parallel>], iteration_bounds = array<i64: 1>, scalar_prefetch = 0 : i64, scratch_operands = 0 : i64, tpu.core_type = #tpu.core_type<tc>, window_params = [{transform_indices = @transform_0, window_bounds = array<i64: 4, 512>}, {transform_indices = @transform_1, window_bounds = array<i64: 4, 512>}]} {
    %c0 = arith.constant 0 : index
    %c0_0 = arith.constant 0 : index
    %0 = vector.load %arg1[%c0, %c0_0] : memref<4x512xf32, #tpu.memory_space<vmem>>, vector<4x512xf32>
    %cst = arith.constant 8.000000e+00 : f32
    %1 = vector.broadcast %cst : f32 to vector<4x512xf32>
    %2 = arith.divf %0, %1 : vector<4x512xf32>
    %c0_1 = arith.constant 0 : index
    %c0_2 = arith.constant 0 : index
    %3 = vector.load %arg2[%c0_1, %c0_2] : memref<4x512xf32, #tpu.memory_space<vmem>>, vector<4x512xf32>
    tpu.vector_store %arg2[%c0_1, %c0_2], %2 {strides = array<i32>} : memref<4x512xf32, #tpu.memory_space<vmem>>, vector<4x512xf32>,
    return
  }
  func.func @transform_0(%arg0: i32) -> (i32, i32) {
    %c0_i32 = arith.constant 0 : i32
    %c0_i32_0 = arith.constant 0 : i32
    return %arg0, %c0_i32 : i32, i32
  }
  func.func @transform_1(%arg0: i32) -> (i32, i32) {
    %c0_i32 = arith.constant 0 : i32
    %c0_i32_0 = arith.constant 0 : i32
    return %arg0, %c0_i32 : i32, i32
  }
}

</mosaic_0001>

<llo_original>
// kernel: tpu_custom_call.1
$region0: #{tpu_custom_call.1}
  #allocation0 [shape = 'u32[]', space=smem, size = 0x4, offset = 0x4, fixed_abs, tag = 'smem constant byte address 0x4 - core index']
  #allocation1 [shape = 'u32[144,128]{1,0:T(1,128)}', space=vmem, size = 0x12000, scoped, tag = 'internal scratch']
  %s0 = inlined_call_operand.hbm [shape: f32[4,512], index: 0, kind: input, shape index: {}]
  %s1 = inlined_call_operand.hbm [shape: f32[4,512], index: 1, kind: output, shape index: {}]
  %s2 = sld [smem:[#allocation0]]
  $region18: #{tpu_custom_call.1} parent=0
    _
  %s4 = ssub.s32 1, %s2
  %s5 = scalar_select 0, %s4, %s2
  $region1: #{tpu_custom_call.1} parent=0
    #allocation2 [shape = 'u8[8192]{0}', space=vmem, size = 0x2000, scoped, tag = 'input window, operand 0, single buffered']
    #allocation3 [shape = 's32[1]{0}', space=sflag, size = 0x4, scoped, tag = 'scoped memory for tpu_custom_call.1']
    #allocation4 [shape = 's32[1]{0}', space=sflag, size = 0x4, scoped, tag = 'scoped memory for tpu_custom_call.1']
    #allocation5 [shape = 'u8[8192]{0}', space=vmem, size = 0x2000, scoped, tag = 'output window, operand 0, single buffered']
    %6 = vsyncpa [#allocation3], 0
    %7 = vsyncpa [#allocation4], 0
    // Predicated region
    $region2: #{tpu_custom_call.1} parent=1 // pred_check
      _
    $region3: #{tpu_custom_call.1} parent=1 // pred_check_branch
      %9 = sbr.rel (0) target = $region5
    $region4: #{tpu_custom_call.1} parent=1 // pred_region
      %s11 = ssub.s32 256, 256
      %12 = vsyncadd [#allocation3], %s11
      %s14 = sshll.u32 [#allocation2], 4
      %s15 = int_to_ptr.vmem [resolvable:$true] %s14
      %17 = dma.hbm_to_vmem [thread:$0]  %s0, 256, %s15, [#allocation3]
    $region5: #{tpu_custom_call.1} parent=1 // pred_fallthru
      _
    // Predicated region
    $region6: #{tpu_custom_call.1} parent=1 // pred_check
      _
    $region7: #{tpu_custom_call.1} parent=1 // pred_check_branch
      %19 = sbr.rel (0) target = $region9
    $region8: #{tpu_custom_call.1} parent=1 // pred_region
      %20 = dma.done [#allocation3], 256
    $region9: #{tpu_custom_call.1} parent=1 // pred_fallthru
      _
    %v21 = vld [vmem:[#allocation2] sm:$0xff]
    %v22 = vld [vmem:[#allocation2 + $0x8] sm:$0xff]
    %v23 = vrcp.pop 8.0
    %v24 = vmul.f32 %v21, %v23
    %v25 = vmul.f32 %v22, %v23
    %26 = vst [vmem:[#allocation5] sm:$0xff] %v24
    %27 = vst [vmem:[#allocation5 + $0x8] sm:$0xff] %v25
    // Predicated region
    $region10: #{tpu_custom_call.1} parent=1 // pred_check
      _
    $region11: #{tpu_custom_call.1} parent=1 // pred_check_branch
      %29 = sbr.rel (0) target = $region13
    $region12: #{tpu_custom_call.1} parent=1 // pred_region
      %s31 = ssub.s32 256, 256
      %32 = vsyncadd [#allocation4], %s31
      %s34 = sshll.u32 [#allocation5], 4
      %s35 = int_to_ptr.vmem [resolvable:$true] %s34
      %37 = dma.vmem_to_hbm [thread:$0]  %s35, 256, %s1, [#allocation4]
    $region13: #{tpu_custom_call.1} parent=1 // pred_fallthru
      _
    // Predicated region
    $region14: #{tpu_custom_call.1} parent=1 // pred_check
      _
    $region15: #{tpu_custom_call.1} parent=1 // pred_check_branch
      %39 = sbr.rel (0) target = $region17
    $region16: #{tpu_custom_call.1} parent=1 // pred_region
      %40 = dma.done [#allocation4], 256
    $region17: #{tpu_custom_call.1} parent=1 // pred_fallthru
      _
    %41 = vsyncpa [#allocation3], 1
    %42 = vsyncpa [#allocation4], 1

</llo_original>
